<compile_context>
chip_gen: v7x
topology: tpu7x:2x2x1
jax: 0.10.0
libtpu: 0.0.40
codegen_flags: <defaults>
</compile_context>

<pallas_src>
import functools

import jax
import jax.numpy as jnp
from jax.experimental import pallas as pl
from jax.experimental.pallas import tpu as pltpu


# ----------------------------- hardware query --------------------------------
def _tpu_vmem_capacity():
    try:
        return int(pltpu.get_tpu_info().vmem_capacity_bytes)
    except Exception:
        return 64 << 20          # conservative fallback: v7x has 64 MiB per TC


_VMEM_CAP = _tpu_vmem_capacity()


def _choose_hw_tile(hw, c, itemsize, budget, cap=None):
    """Pixel-tile width (lane axis). Legal widths: the full H*W extent, or a
    multiple of 128 (ragged last tile handled by store masking). `cap` is only
    a testing hint and may be rounded up to 128."""
    def foot(t):
        # double-buffered streamed x block + double-buffered cam output block
        return 2 * c * t * itemsize + 2 * 16 * t * 4
    if hw <= 128:
        return hw                                    # full extent, only option
    limit = hw if cap is None else max(1, min(hw, cap))
    if limit >= hw and foot(hw) <= budget:
        return hw                                    # one tile per batch row
    t = max(128, (limit // 128) * 128)
    while t > 128 and foot(t) > budget:
        t -= 128
    return t


# ------------------------- fused per-scale head kernel ------------------------
def _cls_head_kernel(x_ref, lfea_ref, w1_ref, b1_ref, w2_ref, b2_ref, scale_ref,
                     cam_ref, cls_ref, lfi_ref, *, hw, thw):
    j = pl.program_id(1)

    # --- one-time (per batch row) prologue: AdaptiveLayer on label features ---
    # Tiny (~10 rows); kept in f32 for accuracy. Constant index maps mean the
    # weight blocks are DMA'd once and revisited.
    @pl.when(j == 0)
    def _prologue():
        lf = lfea_ref[...].astype(jnp.float32)                       # (T, K)
        h = jnp.dot(lf, w1_ref[...].astype(jnp.float32),
                    preferred_element_type=jnp.float32)
        h = jnp.maximum(h + b1_ref[...].astype(jnp.float32), 0.0)    # ReLU
        y = jnp.dot(h, w2_ref[...].astype(jnp.float32),
                    preferred_element_type=jnp.float32)
        lfi_ref[...] = y + b2_ref[...].astype(jnp.float32)           # (T, C)
        cls_ref[...] = jnp.zeros_like(cls_ref)

    # --- L2-normalize each pixel column of the (C, thw) tile -----------------
    x = x_ref[0].astype(jnp.float32)                                  # (C, thw)
    ss = jnp.sum(x * x, axis=0, keepdims=True)                        # (1, thw)
    # Zero-norm (or garbage out-of-bounds) columns -> 0 logits, not NaN/inf.
    inv = jnp.where(ss > 0.0, jax.lax.rsqrt(ss), 0.0)
    xn = (x * inv).astype(jnp.bfloat16)

    # --- cosine logits on the MXU: bf16 operands, f32 accumulation -----------
    lfi = lfi_ref[...].astype(jnp.bfloat16)                           # (T, C)
    logits = jnp.dot(lfi, xn, preferred_element_type=jnp.float32)     # (T, thw)
    logits = logits * scale_ref[0, 0]
    cam_ref[0] = logits.astype(cam_ref.dtype)

    # --- fused spatial sum for adaptive_avg_pool2d((1,1)) --------------------
    # Mask lanes past H*W in the ragged last tile (they may hold garbage/NaN).
    col = jax.lax.broadcasted_iota(jnp.int32, logits.shape, 1) + j * thw
    part = jnp.sum(jnp.where(col < hw, logits, 0.0), axis=1, keepdims=True)
    cls_ref[0] = cls_ref[0] + part


@functools.partial(jax.jit, static_argnames=("max_hw_tile",))
def cls_head_scale(feat, l_fea, w1, b1, w2, b2, logit_scale, *, max_hw_tile=None):
    """One ClsNetwork scale.

    feat: (B, C, H, W) native NCHW, l_fea: (T, K), w1: (K, Hd), w2: (Hd, C)
    (transposed vs. PyTorch nn.Linear.weight).  Returns
      cls: (B, T) float32  (mean over H, W of the logits)
      cam: (B, T, H, W) float32  (== out.clone().detach() of the PyTorch head)
    """
    B, C, H, W = feat.shape
    HW = H * W
    T, K = l_fea.shape
    Hd = w1.shape[1]
    assert w1.shape[0] == K and w2.shape == (Hd, C)

    x = feat.reshape(B, C, HW)                    # free reshape, no transpose
    b1r = b1.reshape(1, Hd)
    b2r = b2.reshape(1, C)
    scale = logit_scale.reshape(1, 1).astype(jnp.float32)

    xb = x.dtype.itemsize
    t_pad = max(8, -(-T // 8) * 8)
    resident = 2 * (l_fea.size * l_fea.dtype.itemsize
                    + (w1.size + b1.size) * w1.dtype.itemsize
                    + (w2.size + b2.size) * w2.dtype.itemsize)
    scratch = t_pad * C * 4
    budget = max(4 << 20, (_VMEM_CAP * 3) // 4 - resident - scratch)
    thw = _choose_hw_tile(HW, C, xb, budget, cap=max_hw_tile)
    n_j = -(-HW // thw)

    stream = 2 * C * thw * xb + 2 * t_pad * thw * 4 + 2 * t_pad * 4
    vmem_limit = int(min((_VMEM_CAP * 3) // 4,
                         max(16 << 20,
                             (resident + scratch + stream) * 5 // 4 + (2 << 20))))

    flops = int(B * (2 * T * C * HW + 3 * C * HW)          # cosine matmul + norm
                + B * 2 * T * (K * Hd + Hd * C))            # per-b MLP prologue
    bytes_accessed = int(B * C * HW * xb + B * T * HW * 4 + B * T * 4
                         + (T * K + K * Hd + Hd + Hd * C + C) * 4)

    kernel = functools.partial(_cls_head_kernel, hw=HW, thw=thw)

    cam_flat, cls_sum = pl.pallas_call(
        kernel,
        out_shape=(jax.ShapeDtypeStruct((B, T, HW), jnp.float32),
                   jax.ShapeDtypeStruct((B, T, 1), jnp.float32)),
        grid_spec=pltpu.PrefetchScalarGridSpec(
            num_scalar_prefetch=0,
            grid=(B, n_j),
            in_specs=[
                pl.BlockSpec((1, C, thw), lambda b, j: (b, 0, j)),   # streamed pixels
                pl.BlockSpec((T, K), lambda b, j: (0, 0)),           # label feats (resident)
                pl.BlockSpec((K, Hd), lambda b, j: (0, 0)),          # fc1 weight (resident)
                pl.BlockSpec((1, Hd), lambda b, j: (0, 0)),          # fc1 bias
                pl.BlockSpec((Hd, C), lambda b, j: (0, 0)),          # fc2 weight (resident)
                pl.BlockSpec((1, C), lambda b, j: (0, 0)),           # fc2 bias
                pl.BlockSpec(memory_space=pltpu.MemorySpace.SMEM),   # logit_scale (1,1)
            ],
            out_specs=(
                pl.BlockSpec((1, T, thw), lambda b, j: (b, 0, j)),   # cam (lane-dense)
                pl.BlockSpec((1, T, 1), lambda b, j: (b, 0, 0)),     # pooled sum (resident over j)
            ),
            scratch_shapes=[pltpu.VMEM((T, C), jnp.float32)],        # l_fea_i
        ),
        compiler_params=pltpu.CompilerParams(
            dimension_semantics=("parallel", "arbitrary"),
            vmem_limit_bytes=vmem_limit,
        ),
        cost_estimate=pl.CostEstimate(
            flops=flops, transcendentals=int(B * HW),
            bytes_accessed=bytes_accessed),
    )(x, l_fea, w1, b1r, w2, b2r, scale)

    cam = cam_flat.reshape(B, T, H, W)
    cls = cls_sum[:, :, 0] * (1.0 / float(HW))
    return cls, cam


# ------------------------------ ClsNetwork head ------------------------------
def cls_network_forward(feats, l_fea, adaptive_params, logit_scales, k_list=None):
    """ClsNetwork.forward() after the encoder.
    # TODO(synk): the mix_transformer backbone (pretrained .pth) and the pickled
    # CLIP label-feature file are external deps; `feats` stands in for the
    # encoder outputs and `l_fea` for the pickled label features.
    """
    outputs = []
    for feat, params, scale in zip(feats, adaptive_params, logit_scales):
        cls_i, cam_i = cls_head_scale(feat, l_fea, *params, scale)
        outputs.extend([cls_i, cam_i])       # cam == out.clone().detach() values
    outputs.append(l_fea)
    if k_list is not None:
        outputs.append(tuple(k_list))
    return tuple(outputs)


def init_adaptive_params(key, in_dim, n_ratio, out_dim, dtype=jnp.float32):
    """trunc_normal_(std=0.02) weights (stored transposed), zero biases."""
    hidden_dim = int(in_dim * n_ratio)
    k1, k2 = jax.random.split(key)
    w1 = (jax.random.truncated_normal(k1, -2.0, 2.0, (in_dim, hidden_dim))
          * 0.02).astype(dtype)
    b1 = jnp.zeros((hidden_dim,), jnp.float32)
    w2 = (jax.random.truncated_normal(k2, -2.0, 2.0, (hidden_dim, out_dim))
          * 0.02).astype(dtype)
    b2 = jnp.zeros((out_dim,), jnp.float32)
    return w1, b1, w2, b2


# ----------------------------------- demo ------------------------------------
if __name__ == "__main__":
    key = jax.random.PRNGKey(0)

    # Shapes consistent with ClsNetwork(mit_b1, stride=[4,2,2,1], n_ratio=0.5):
    # embed_dims = [64, 128, 320, 512]; a 64x64 input gives 16/8/4/4 maps.
    batch = 2
    embed_dims = [64, 128, 320, 512]
    spatial = [16, 8, 4, 4]
    n_ratio = 0.5                       # AdaptiveLayer hidden = int(512*0.5) = 256
    k_list = [2, 3, 2, 3]
    total_classes = sum(k_list)         # 10 label features, 512-d each

    keys = jax.random.split(key, 12)
    feats = [jax.random.normal(keys[i], (batch, embed_dims[i], s, s), jnp.float32)
             for i, s in enumerate(spatial)]
    # TODO(synk): stand-in for the pickled CLIP label features (external file).
    l_fea = jax.random.normal(keys[4], (total_classes, 512), jnp.float32)
    params = [init_adaptive_params(keys[5 + i], 512, n_ratio, embed_dims[i])
              for i in range(4)]
    logit_scales = [jnp.ones((1,), jnp.float32) / 0.07 for _ in range(4)]

    outs = cls_network_forward(feats, l_fea, params, logit_scales, k_list)
    jax.block_until_ready([o for o in outs if isinstance(o, jax.Array)])

    # ---------------- pure-JAX (f32) reference check ----------------
    def ref_scale(feat, lf, w1, b1, w2, b2, scale):
        b, c, h, w = feat.shape
        xf = jnp.transpose(feat.astype(jnp.float32), (0, 2, 3, 1)).reshape(-1, c)
        lfi = jnp.maximum(lf @ w1 + b1, 0.0) @ w2 + b2
        xn = xf / jnp.linalg.norm(xf, axis=-1, keepdims=True)
        logits = scale[0] * (xn @ lfi.T)
        cam = logits.reshape(b, h, w, -1).transpose(0, 3, 1, 2)
        return jnp.mean(cam, axis=(2, 3)), cam

    ok = True
    for i in range(4):
        cls_ref, cam_ref = ref_scale(feats[i], l_fea, *params[i], logit_scales[i])
        cls_i, cam_i = outs[2 * i], outs[2 * i + 1]
        h = w = spatial[i]
        assert cls_i.shape == (batch, total_classes)
        assert cam_i.shape == (batch, total_classes, h, w)
        ok &= bool(jnp.allclose(cam_i, cam_ref, atol=5e-2, rtol=5e-2))
        ok &= bool(jnp.allclose(cls_i, cls_ref, atol=5e-2, rtol=5e-2))
    assert ok, "mismatch vs pure-JAX reference"

    # ---- ragged / multi-tile path: HW=400 with forced 128-wide pixel tiles ----
    feat_r = jax.random.normal(keys[9], (batch, embed_dims[0], 20, 20), jnp.float32)
    cls_r, cam_r = cls_head_scale(feat_r, l_fea, *params[0], logit_scales[0],
                                  max_hw_tile=128)
    cls_rr, cam_rr = ref_scale(feat_r, l_fea, *params[0], logit_scales[0])
    jax.block_until_ready(cam_r)
    assert jnp.allclose(cam_r, cam_rr, atol=5e-2, rtol=5e-2)
    assert jnp.allclose(cls_r, cls_rr, atol=5e-2, rtol=5e-2)

    # ------------- bf16 feature-map fast path (f32 accumulation) -------------
    feat_b = feats[3].astype(jnp.bfloat16)
    cls_b, cam_b = cls_head_scale(feat_b, l_fea, *params[3], logit_scales[3])
    cls_br, cam_br = ref_scale(feat_b.astype(jnp.float32), l_fea, *params[3],
                               logit_scales[3])
    jax.block_until_ready(cam_b)
    assert cam_b.dtype == jnp.float32
    assert jnp.allclose(cam_b, cam_br, atol=8e-2, rtol=8e-2)
    assert jnp.allclose(cls_b, cls_br, atol=8e-2, rtol=8e-2)

    print("KERNEL_OK")
</pallas_src>

<mosaic_0001>
module attributes {stable_mosaic.version = 11 : i64} {
  func.func @_cls_head_kernel(%arg0: i32, %arg1: i32, %arg2: memref<1x64x256xf32, #tpu.memory_space<vmem>>, %arg3: memref<10x512xf32, #tpu.memory_space<vmem>>, %arg4: memref<512x256xf32, #tpu.memory_space<vmem>>, %arg5: memref<1x256xf32, #tpu.memory_space<vmem>>, %arg6: memref<256x64xf32, #tpu.memory_space<vmem>>, %arg7: memref<1x64xf32, #tpu.memory_space<vmem>>, %arg8: memref<1x1xf32, #tpu.memory_space<smem>>, %arg9: memref<1x10x256xf32, #tpu.memory_space<vmem>>, %arg10: memref<1x10x1xf32, #tpu.memory_space<vmem>>, %arg11: memref<10x64xf32, #tpu.memory_space<vmem>>) attributes {dimension_semantics = [#tpu.dimension_semantics<parallel>, #tpu.dimension_semantics<arbitrary>], iteration_bounds = array<i64: 2, 1>, scalar_prefetch = 0 : i64, scratch_operands = 1 : i64, tpu.core_type = #tpu.core_type<tc>, window_params = [{transform_indices = @transform_0, window_bounds = array<i64: 1, 64, 256>}, {pipeline_mode = #tpu.pipeline_mode<synchronous>, transform_indices = @transform_1, window_bounds = array<i64: 10, 512>}, {pipeline_mode = #tpu.pipeline_mode<synchronous>, transform_indices = @transform_2, window_bounds = array<i64: 512, 256>}, {pipeline_mode = #tpu.pipeline_mode<synchronous>, transform_indices = @transform_3, window_bounds = array<i64: 1, 256>}, {pipeline_mode = #tpu.pipeline_mode<synchronous>, transform_indices = @transform_4, window_bounds = array<i64: 256, 64>}, {pipeline_mode = #tpu.pipeline_mode<synchronous>, transform_indices = @transform_5, window_bounds = array<i64: 1, 64>}, {transform_indices = @transform_6, window_bounds = array<i64: 1, 1>}, {transform_indices = @transform_7, window_bounds = array<i64: 1, 10, 256>}, {transform_indices = @transform_8, window_bounds = array<i64: 1, 10, 1>}]} {
    %c0_i32 = arith.constant 0 : i32
    %0 = arith.cmpi eq, %arg1, %c0_i32 : i32
    %1 = arith.extui %0 : i1 to i32
    %c0_i32_0 = arith.constant 0 : i32
    %2 = arith.cmpi ne, %1, %c0_i32_0 : i32
    scf.if %2 {
      %c0_22 = arith.constant 0 : index
      %c0_23 = arith.constant 0 : index
      %41 = vector.load %arg3[%c0_22, %c0_23] : memref<10x512xf32, #tpu.memory_space<vmem>>, vector<10x512xf32>
      %c0_24 = arith.constant 0 : index
      %c0_25 = arith.constant 0 : index
      %42 = vector.load %arg4[%c0_24, %c0_25] : memref<512x256xf32, #tpu.memory_space<vmem>>, vector<512x256xf32>
      %cst_26 = arith.constant dense<0.000000e+00> : vector<10x256xf32>
      %43 = tpu.matmul %41, %42, %cst_26 {dimension_numbers = #tpu.dot_dimension_numbers<[1], [0], [0], [1], [0, 0, 1, 1], [], []>} : vector<10x512xf32>, vector<512x256xf32>, vector<10x256xf32> -> vector<10x256xf32>
      %c0_27 = arith.constant 0 : index
      %c0_28 = arith.constant 0 : index
      %44 = vector.load %arg5[%c0_27, %c0_28] : memref<1x256xf32, #tpu.memory_space<vmem>>, vector<1x256xf32>
      %45 = vector.broadcast %44 : vector<1x256xf32> to vector<10x256xf32>
      %46 = arith.addf %43, %45 : vector<10x256xf32>
      %cst_29 = arith.constant 0.000000e+00 : f32
      %47 = vector.broadcast %cst_29 : f32 to vector<10x256xf32>
      %48 = arith.maximumf %46, %47 : vector<10x256xf32>
      %c0_30 = arith.constant 0 : index
      %c0_31 = arith.constant 0 : index
      %49 = vector.load %arg6[%c0_30, %c0_31] : memref<256x64xf32, #tpu.memory_space<vmem>>, vector<256x64xf32>
      %cst_32 = arith.constant dense<0.000000e+00> : vector<10x64xf32>
      %50 = tpu.matmul %48, %49, %cst_32 {dimension_numbers = #tpu.dot_dimension_numbers<[1], [0], [0], [1], [0, 0, 1, 1], [], []>} : vector<10x256xf32>, vector<256x64xf32>, vector<10x64xf32> -> vector<10x64xf32>
      %c0_33 = arith.constant 0 : index
      %c0_34 = arith.constant 0 : index
      %51 = vector.load %arg7[%c0_33, %c0_34] : memref<1x64xf32, #tpu.memory_space<vmem>>, vector<1x64xf32>
      %52 = vector.broadcast %51 : vector<1x64xf32> to vector<10x64xf32>
      %53 = arith.addf %50, %52 : vector<10x64xf32>
      %c0_35 = arith.constant 0 : index
      %c0_36 = arith.constant 0 : index
      %54 = vector.load %arg11[%c0_35, %c0_36] : memref<10x64xf32, #tpu.memory_space<vmem>>, vector<10x64xf32>
      tpu.vector_store %arg11[%c0_35, %c0_36], %53 {strides = array<i32>} : memref<10x64xf32, #tpu.memory_space<vmem>>, vector<10x64xf32>,
      %cst_37 = arith.constant 0.000000e+00 : f32
      %55 = vector.broadcast %cst_37 : f32 to vector<1x10x1xf32>
      %c0_38 = arith.constant 0 : index
      %c0_39 = arith.constant 0 : index
      %c0_40 = arith.constant 0 : index
      %56 = vector.load %arg10[%c0_38, %c0_39, %c0_40] : memref<1x10x1xf32, #tpu.memory_space<vmem>>, vector<1x10x1xf32>
      tpu.vector_store %arg10[%c0_38, %c0_39, %c0_40], %55 {strides = array<i32>} : memref<1x10x1xf32, #tpu.memory_space<vmem>>, vector<1x10x1xf32>,
    } else {
    }
    %c0 = arith.constant 0 : index
    %c0_1 = arith.constant 0 : index
    %c0_2 = arith.constant 0 : index
    %3 = vector.load %arg2[%c0, %c0_1, %c0_2] : memref<1x64x256xf32, #tpu.memory_space<vmem>>, vector<1x64x256xf32>
    %4 = vector.shape_cast %3 : vector<1x64x256xf32> to vector<64x256xf32>
    %5 = arith.mulf %4, %4 : vector<64x256xf32>
    %cst = arith.constant dense<0.000000e+00> : vector<256xf32>
    %6 = vector.multi_reduction <add>, %5, %cst [0] : vector<64x256xf32> to vector<256xf32>
    %7 = vector.shape_cast %6 : vector<256xf32> to vector<1x256xf32>
    %cst_3 = arith.constant 0.000000e+00 : f32
    %8 = vector.broadcast %cst_3 : f32 to vector<1x256xf32>
    %9 = arith.cmpf ogt, %7, %8 : vector<1x256xf32>
    %10 = math.rsqrt %7 : vector<1x256xf32>
    %cst_4 = arith.constant 0.000000e+00 : f32
    %11 = vector.broadcast %cst_4 : f32 to vector<1x256xf32>
    %12 = arith.select %9, %10, %11 : vector<1x256xi1>, vector<1x256xf32>
    %13 = vector.broadcast %12 : vector<1x256xf32> to vector<64x256xf32>
    %14 = arith.mulf %4, %13 : vector<64x256xf32>
    %15 = arith.truncf %14 : vector<64x256xf32> to vector<64x256xbf16>
    %c0_5 = arith.constant 0 : index
    %c0_6 = arith.constant 0 : index
    %16 = vector.load %arg11[%c0_5, %c0_6] : memref<10x64xf32, #tpu.memory_space<vmem>>, vector<10x64xf32>
    %17 = arith.truncf %16 : vector<10x64xf32> to vector<10x64xbf16>
    %cst_7 = arith.constant dense<0.000000e+00> : vector<10x256xf32>
    %18 = tpu.matmul %17, %15, %cst_7 {dimension_numbers = #tpu.dot_dimension_numbers<[1], [0], [0], [1], [0, 0, 1, 1], [], []>} : vector<10x64xbf16>, vector<64x256xbf16>, vector<10x256xf32> -> vector<10x256xf32>
    %c0_8 = arith.constant 0 : index
    %c0_9 = arith.constant 0 : index
    %19 = memref.load %arg8[%c0_8, %c0_9] : memref<1x1xf32, #tpu.memory_space<smem>>
    %20 = vector.broadcast %19 : f32 to vector<10x256xf32>
    %21 = arith.mulf %18, %20 : vector<10x256xf32>
    %c0_10 = arith.constant 0 : index
    %c0_11 = arith.constant 0 : index
    %c0_12 = arith.constant 0 : index
    %22 = vector.load %arg9[%c0_10, %c0_11, %c0_12] : memref<1x10x256xf32, #tpu.memory_space<vmem>>, vector<1x10x256xf32>
    %23 = vector.shape_cast %22 : vector<1x10x256xf32> to vector<10x256xf32>
    %24 = vector.shape_cast %21 : vector<10x256xf32> to vector<1x10x256xf32>
    tpu.vector_store %arg9[%c0_10, %c0_11, %c0_12], %24 {strides = array<i32>} : memref<1x10x256xf32, #tpu.memory_space<vmem>>, vector<1x10x256xf32>,
    %25 = tpu.iota {dimensions = array<i32: 1>} : vector<10x256xi32>
    %c256_i32 = arith.constant 256 : i32
    %26 = arith.muli %arg1, %c256_i32 : i32
    %27 = vector.broadcast %26 : i32 to vector<10x256xi32>
    %28 = arith.addi %25, %27 : vector<10x256xi32>
    %c256_i32_13 = arith.constant 256 : i32
    %29 = vector.broadcast %c256_i32_13 : i32 to vector<10x256xi32>
    %30 = arith.cmpi slt, %28, %29 : vector<10x256xi32>
    %cst_14 = arith.constant 0.000000e+00 : f32
    %31 = vector.broadcast %cst_14 : f32 to vector<10x256xf32>
    %32 = arith.select %30, %21, %31 : vector<10x256xi1>, vector<10x256xf32>
    %cst_15 = arith.constant dense<0.000000e+00> : vector<10xf32>
    %33 = vector.multi_reduction <add>, %32, %cst_15 [1] : vector<10x256xf32> to vector<10xf32>
    %34 = vector.shape_cast %33 : vector<10xf32> to vector<10x1xf32>
    %c0_16 = arith.constant 0 : index
    %c0_17 = arith.constant 0 : index
    %c0_18 = arith.constant 0 : index
    %35 = vector.load %arg10[%c0_16, %c0_17, %c0_18] : memref<1x10x1xf32, #tpu.memory_space<vmem>>, vector<1x10x1xf32>
    %36 = vector.shape_cast %35 : vector<1x10x1xf32> to vector<10x1xf32>
    %37 = arith.addf %36, %34 : vector<10x1xf32>
    %c0_19 = arith.constant 0 : index
    %c0_20 = arith.constant 0 : index
    %c0_21 = arith.constant 0 : index
    %38 = vector.load %arg10[%c0_19, %c0_20, %c0_21] : memref<1x10x1xf32, #tpu.memory_space<vmem>>, vector<1x10x1xf32>
    %39 = vector.shape_cast %38 : vector<1x10x1xf32> to vector<10x1xf32>
    %40 = vector.shape_cast %37 : vector<10x1xf32> to vector<1x10x1xf32>
    tpu.vector_store %arg10[%c0_19, %c0_20, %c0_21], %40 {strides = array<i32>} : memref<1x10x1xf32, #tpu.memory_space<vmem>>, vector<1x10x1xf32>,
    return
  }
  func.func @transform_0(%arg0: i32, %arg1: i32) -> (i32, i32, i32) {
    %c0_i32 = arith.constant 0 : i32
    %c0_i32_0 = arith.constant 0 : i32
    return %arg0, %c0_i32, %arg1 : i32, i32, i32
  }
  func.func @transform_1(%arg0: i32, %arg1: i32) -> (i32, i32) {
    %c0_i32 = arith.constant 0 : i32
    %c0_i32_0 = arith.constant 0 : i32
    %c0_i32_1 = arith.constant 0 : i32
    return %c0_i32, %c0_i32_0 : i32, i32
  }
  func.func @transform_2(%arg0: i32, %arg1: i32) -> (i32, i32) {
    %c0_i32 = arith.constant 0 : i32
    %c0_i32_0 = arith.constant 0 : i32
    %c0_i32_1 = arith.constant 0 : i32
    return %c0_i32, %c0_i32_0 : i32, i32
  }
  func.func @transform_3(%arg0: i32, %arg1: i32) -> (i32, i32) {
    %c0_i32 = arith.constant 0 : i32
    %c0_i32_0 = arith.constant 0 : i32
    %c0_i32_1 = arith.constant 0 : i32
    return %c0_i32, %c0_i32_0 : i32, i32
  }
  func.func @transform_4(%arg0: i32, %arg1: i32) -> (i32, i32) {
    %c0_i32 = arith.constant 0 : i32
    %c0_i32_0 = arith.constant 0 : i32
    %c0_i32_1 = arith.constant 0 : i32
    return %c0_i32, %c0_i32_0 : i32, i32
  }
  func.func @transform_5(%arg0: i32, %arg1: i32) -> (i32, i32) {
    %c0_i32 = arith.constant 0 : i32
    %c0_i32_0 = arith.constant 0 : i32
    %c0_i32_1 = arith.constant 0 : i32
    return %c0_i32, %c0_i32_0 : i32, i32
  }
  func.func @transform_6(%arg0: i32, %arg1: i32) -> (i32, i32) {
    %c0_i32 = arith.constant 0 : i32
    %c0_i32_0 = arith.constant 0 : i32
    %c0_i32_1 = arith.constant 0 : i32
    return %c0_i32, %c0_i32_0 : i32, i32
  }
  func.func @transform_7(%arg0: i32, %arg1: i32) -> (i32, i32, i32) {
    %c0_i32 = arith.constant 0 : i32
    %c0_i32_0 = arith.constant 0 : i32
    return %arg0, %c0_i32, %arg1 : i32, i32, i32
  }
  func.func @transform_8(%arg0: i32, %arg1: i32) -> (i32, i32, i32) {
    %c0_i32 = arith.constant 0 : i32
    %c0_i32_0 = arith.constant 0 : i32
    %c0_i32_1 = arith.constant 0 : i32
    return %arg0, %c0_i32, %c0_i32_0 : i32, i32, i32
  }
}

</mosaic_0001>

<llo_original>
// kernel: cls_head_scale.1
$region0: #{cls_head_scale.1}
  #allocation0 [shape = 'u32[]', space=smem, size = 0x4, offset = 0x4, fixed_abs, tag = 'smem constant byte address 0x4 - core index']
  #allocation1 [shape = 'u32[144,128]{1,0:T(1,128)}', space=vmem, size = 0x12000, scoped, tag = 'internal scratch']
  #allocation2 [shape = 'f32[10,64]{1,0:T(8,128)}', space=vmem, size = 0x2000, scoped, tag = 'scratch operand']
  #allocation3 [shape = 'f32[1,1]{1,0:T(1,128)S(6)}', space=smem, size = 0x200, scoped, tag = 'scoped memory for cls_head_scale.1']
  %s0 = inlined_call_operand.vmem [shape: f32[2,64,256], index: 0, kind: input, shape index: {}]
  %s1 = inlined_call_operand.hbm [shape: f32[10,512], index: 1, kind: input, shape index: {}]
  %s2 = inlined_call_operand.vmem [shape: f32[512,256], index: 2, kind: input, shape index: {}]
  %s3 = inlined_call_operand.vmem [shape: f32[1,256], index: 3, kind: input, shape index: {}]
  %s4 = inlined_call_operand.vmem [shape: f32[256,64], index: 4, kind: input, shape index: {}]
  %s5 = inlined_call_operand.vmem [shape: f32[1,64], index: 5, kind: input, shape index: {}]
  %s6 = inlined_call_operand.<no memory space> [shape: f32[1,1], index: 6, kind: input, shape index: {}]
  %s7 = inlined_call_operand.vmem [shape: f32[2,10,256], index: 7, kind: output, shape index: {0}]
  %s8 = inlined_call_operand.vmem [shape: f32[2,10,1], index: 8, kind: output, shape index: {1}]
  %9 = xla_tuple %s7, %s8
  %s10 = sld [smem:[#allocation0]]
  $region77: #{cls_head_scale.1} parent=0
    _
  %s12 = ssub.s32 1, %s10
  %s13 = scalar_select 0, %s12, %s10
  %14 = sst [smem:[#allocation3]] %s6
  $region1: #{cls_head_scale.1} parent=0
    #allocation4 [shape = 'u8[32768]{0}', space=vmem, size = 0x8000, scoped, tag = 'input window, operand 1, single buffered']
    #allocation5 [shape = 's32[2]{0}', space=sflag, size = 0x8, scoped, tag = 'scoped memory for cls_head_scale.1']
    %15 = vsyncpa [#allocation5], 0
    loop: start=0, step=1, limit=4
    $region2: #{cls_head_scale.1} parent=1 // loop_pre_header
      _
    $region3: #{cls_head_scale.1} parent=1 // loop_header
      %s17 = sphi 0, %s21
      %p18 = scmp.ge.s32.totalorder %s17, 4
      %s24 = sphi 0, %s36
      %s25 = sphi 0, %s32
      %s26 = sphi 0, %s24
      %s27 = sphi 0, %s25
      %s28 = sphi 0, %s26
      %s29 = sphi 0, %s27
      %s41 = sphi 0, %s43
      %s44 = sphi 0, %s41
      %s45 = sphi 0, %s44
      %s61 = sphi 0, %s45
      %s65 = sphi 0, %s65
      %s67 = sphi 0, %s65
      %s68 = sphi 0, %s67
      %s82 = sphi 0, %s68
      %s86 = sphi 0, %s86
      %s88 = sphi 0, %s86
      %s89 = sphi 0, %s88
      %s103 = sphi 0, %s89
      %s107 = sphi 0, %s107
      %s109 = sphi 0, %s107
      %s110 = sphi 0, %s109
      %s124 = sphi 0, %s110
      %s128 = sphi 0, %s128
      %s130 = sphi 0, %s128
      %s131 = sphi 0, %s130
      %s145 = sphi 0, %s131
      %s149 = sphi 0, %s149
      %s151 = sphi 0, %s149
      %s152 = sphi 0, %s151
      %s166 = sphi 0, %s152
      %s170 = sphi 0, %s170
      %s172 = sphi 0, %s170
      %s173 = sphi 0, %s172
      %s187 = sphi 0, %s173
      %s195 = sphi 0, %s197
      %s198 = sphi 0, %s195
      %s199 = sphi 0, %s198
      %s215 = sphi 0, %s199
      %s221 = sphi 0, %s223
      %s224 = sphi 0, %s221
      %s225 = sphi 0, %s224
      %s241 = sphi 0, %s225
    $region4: #{cls_head_scale.1} parent=1 // loop_header_branch
      %20 = sbr.rel (%p18) target = $region8
    $region5: #{cls_head_scale.1} parent=1 // loop_body
      %s22 = ssub.s32 %s17, 1
      %s23 = ssub.s32 %s17, 2
      %s30 = sadd.s32 1, %s25
      %p31 = scmp.ge.s32.totalorder %s30, 1
      %s32 = scalar_select %p31, 0, %s30
      %s33 = sadd.s32 1, %s24
      %s34 = scalar_select %p31, %s33, %s24
      %p35 = scmp.ge.s32.totalorder %s34, 2
      %s36 = scalar_select %p35, 0, %s34
      %s37 = ssub.s32 %s24, %s36
      %s38 = ssub.s32 %s25, %s32
      %s39 = sor.u32 %s37, %s38
      %p40 = scmp.eq.s32.totalorder %s39, 0
      %s42 = sadd.s32 %s41, 1
      %s43 = scalar_select %p40, %s41, %s42
      %p46 = pneg %p40
      %p47 = scmp.eq.s32.totalorder %s17, 1
      %p48 = por %p46, %p47
      %p49 = scmp.ne.s32.totalorder %s41, %s44
      %p50 = scmp.eq.s32.totalorder %s17, 0
      %p51 = por %p49, %p50
      %p52 = scmp.ne.s32.totalorder %s41, %s44
      %p53 = scmp.eq.s32.totalorder %s22, 1
      %p54 = por %p52, %p53
      %p55 = scmp.ne.s32.totalorder %s44, %s45
      %p56 = scmp.eq.s32.totalorder %s22, 0
      %p57 = por %p55, %p56
      %p58 = scmp.ne.s32.totalorder %s44, %s45
      %p59 = scmp.eq.s32.totalorder %s23, 1
      %p60 = por %p58, %p59
      %p62 = scmp.ne.s32.totalorder %s45, %s61
      %p63 = scmp.eq.s32.totalorder %s23, 0
      %p64 = por %p62, %p63
      %s66 = sadd.s32 %s65, 1
      %p69 = scmp.eq.s32.totalorder %s17, 1
      %p70 = scmp.ne.s32.totalorder %s65, %s67
      %p71 = scmp.eq.s32.totalorder %s17, 0
      %p72 = por %p70, %p71
      %p73 = scmp.ne.s32.totalorder %s65, %s67
      %p74 = scmp.eq.s32.totalorder %s22, 1
      %p75 = por %p73, %p74
      %p76 = scmp.ne.s32.totalorder %s67, %s68
      %p77 = scmp.eq.s32.totalorder %s22, 0
      %p78 = por %p76, %p77
      %p79 = scmp.ne.s32.totalorder %s67, %s68
      %p80 = scmp.eq.s32.totalorder %s23, 1
      %p81 = por %p79, %p80
      %p83 = scmp.ne.s32.totalorder %s68, %s82
      %p84 = scmp.eq.s32.totalorder %s23, 0
      %p85 = por %p83, %p84
      %s87 = sadd.s32 %s86, 1
      %p90 = scmp.eq.s32.totalorder %s17, 1
      %p91 = scmp.ne.s32.totalorder %s86, %s88
      %p92 = scmp.eq.s32.totalorder %s17, 0
      %p93 = por %p91, %p92
      %p94 = scmp.ne.s32.totalorder %s86, %s88
      %p95 = scmp.eq.s32.totalorder %s22, 1
      %p96 = por %p94, %p95
      %p97 = scmp.ne.s32.totalorder %s88, %s89
      %p98 = scmp.eq.s32.totalorder %s22, 0
      %p99 = por %p97, %p98
      %p100 = scmp.ne.s32.totalorder %s88, %s89
      %p101 = scmp.eq.s32.totalorder %s23, 1
      %p102 = por %p100, %p101
      %p104 = scmp.ne.s32.totalorder %s89, %s103
      %p105 = scmp.eq.s32.totalorder %s23, 0
      %p106 = por %p104, %p105
      %s108 = sadd.s32 %s107, 1
      %p111 = scmp.eq.s32.totalorder %s17, 1
      %p112 = scmp.ne.s32.totalorder %s107, %s109
      %p113 = scmp.eq.s32.totalorder %s17, 0
      %p114 = por %p112, %p113
      %p115 = scmp.ne.s32.totalorder %s107, %s109
      %p116 = scmp.eq.s32.totalorder %s22, 1
      %p117 = por %p115, %p116
      %p118 = scmp.ne.s32.totalorder %s109, %s110
      %p119 = scmp.eq.s32.totalorder %s22, 0
      %p120 = por %p118, %p119
      %p121 = scmp.ne.s32.totalorder %s109, %s110
      %p122 = scmp.eq.s32.totalorder %s23, 1
      %p123 = por %p121, %p122
      %p125 = scmp.ne.s32.totalorder %s110, %s124
      %p126 = scmp.eq.s32.totalorder %s23, 0
      %p127 = por %p125, %p126
      %s129 = sadd.s32 %s128, 1
      %p132 = scmp.eq.s32.totalorder %s17, 1
      %p133 = scmp.ne.s32.totalorder %s128, %s130
      %p134 = scmp.eq.s32.totalorder %s17, 0
      %p135 = por %p133, %p134
      %p136 = scmp.ne.s32.totalorder %s128, %s130
      %p137 = scmp.eq.s32.totalorder %s22, 1
      %p138 = por %p136, %p137
      %p139 = scmp.ne.s32.totalorder %s130, %s131
      %p140 = scmp.eq.s32.totalorder %s22, 0
      %p141 = por %p139, %p140
      %p142 = scmp.ne.s32.totalorder %s130, %s131
      %p143 = scmp.eq.s32.totalorder %s23, 1
      %p144 = por %p142, %p143
      %p146 = scmp.ne.s32.totalorder %s131, %s145
      %p147 = scmp.eq.s32.totalorder %s23, 0
      %p148 = por %p146, %p147
      %s150 = sadd.s32 %s149, 1
      %p153 = scmp.eq.s32.totalorder %s17, 1
      %p154 = scmp.ne.s32.totalorder %s149, %s151
      %p155 = scmp.eq.s32.totalorder %s17, 0
      %p156 = por %p154, %p155
      %p157 = scmp.ne.s32.totalorder %s149, %s151
      %p158 = scmp.eq.s32.totalorder %s22, 1
      %p159 = por %p157, %p158
      %p160 = scmp.ne.s32.totalorder %s151, %s152
      %p161 = scmp.eq.s32.totalorder %s22, 0
      %p162 = por %p160, %p161
      %p163 = scmp.ne.s32.totalorder %s151, %s152
      %p164 = scmp.eq.s32.totalorder %s23, 1
      %p165 = por %p163, %p164
      %p167 = scmp.ne.s32.totalorder %s152, %s166
      %p168 = scmp.eq.s32.totalorder %s23, 0
      %p169 = por %p167, %p168
      %s171 = sadd.s32 %s170, 1
      %p174 = scmp.eq.s32.totalorder %s17, 1
      %p175 = scmp.ne.s32.totalorder %s170, %s172
      %p176 = scmp.eq.s32.totalorder %s17, 0
      %p177 = por %p175, %p176
      %p178 = scmp.ne.s32.totalorder %s170, %s172
      %p179 = scmp.eq.s32.totalorder %s22, 1
      %p180 = por %p178, %p179
      %p181 = scmp.ne.s32.totalorder %s172, %s173
      %p182 = scmp.eq.s32.totalorder %s22, 0
      %p183 = por %p181, %p182
      %p184 = scmp.ne.s32.totalorder %s172, %s173
      %p185 = scmp.eq.s32.totalorder %s23, 1
      %p186 = por %p184, %p185
      %p188 = scmp.ne.s32.totalorder %s173, %s187
      %p189 = scmp.eq.s32.totalorder %s23, 0
      %p190 = por %p188, %p189
      %s191 = ssub.s32 %s24, %s36
      %s192 = ssub.s32 %s25, %s32
      %s193 = sor.u32 %s191, %s192
      %p194 = scmp.eq.s32.totalorder %s193, 0
      %s196 = sadd.s32 %s195, 1
      %s197 = scalar_select %p194, %s195, %s196
      %p200 = pneg %p194
      %p201 = scmp.eq.s32.totalorder %s17, 1
      %p202 = por %p200, %p201
      %p203 = scmp.ne.s32.totalorder %s195, %s198
      %p204 = scmp.eq.s32.totalorder %s17, 0
      %p205 = por %p203, %p204
      %p206 = scmp.ne.s32.totalorder %s195, %s198
      %p207 = scmp.eq.s32.totalorder %s22, 1
      %p208 = por %p206, %p207
      %p209 = scmp.ne.s32.totalorder %s198, %s199
      %p210 = scmp.eq.s32.totalorder %s22, 0
      %p211 = por %p209, %p210
      %p212 = scmp.ne.s32.totalorder %s198, %s199
      %p213 = scmp.eq.s32.totalorder %s23, 1
      %p214 = por %p212, %p213
      %p216 = scmp.ne.s32.totalorder %s199, %s215
      %p217 = scmp.eq.s32.totalorder %s23, 0
      %p218 = por %p216, %p217
      %s219 = ssub.s32 %s24, %s36
      %p220 = scmp.eq.s32.totalorder %s219, 0
      %s222 = sadd.s32 %s221, 1
      %s223 = scalar_select %p220, %s221, %s222
      %p226 = pneg %p220
      %p227 = scmp.eq.s32.totalorder %s17, 1
      %p228 = por %p226, %p227
      %p229 = scmp.ne.s32.totalorder %s221, %s224
      %p230 = scmp.eq.s32.totalorder %s17, 0
      %p231 = por %p229, %p230
      %p232 = scmp.ne.s32.totalorder %s221, %s224
      %p233 = scmp.eq.s32.totalorder %s22, 1
      %p234 = por %p232, %p233
      %p235 = scmp.ne.s32.totalorder %s224, %s225
      %p236 = scmp.eq.s32.totalorder %s22, 0
      %p237 = por %p235, %p236
      %p238 = scmp.ne.s32.totalorder %s224, %s225
      %p239 = scmp.eq.s32.totalorder %s23, 1
      %p240 = por %p238, %p239
      %p242 = scmp.ne.s32.totalorder %s225, %s241
      %p243 = scmp.eq.s32.totalorder %s23, 0
      %p244 = por %p242, %p243
      %p245 = scmp.le.s32.totalorder 1, %s17
      %p246 = scmp.lt.s32.totalorder %s17, 3
      %p247 = pnand %p245, %p246
      %p248 = pneg %p247
      // Predicated region
      $region9: #{cls_head_scale.1} parent=5 // pred_check
        _
      $region10: #{cls_head_scale.1} parent=5 // pred_check_branch
        %250 = sbr.rel (%p247) target = $region12
      $region11: #{cls_head_scale.1} parent=5 // pred_region
        %s251 = ssub.s32 %s17, 1
        // Predicated region
        $region13: #{cls_head_scale.1} parent=11 // pred_check
          %p252 = pneg %p78
        $region14: #{cls_head_scale.1} parent=11 // pred_check_branch
          %254 = sbr.rel (%p252) target = $region16
        $region15: #{cls_head_scale.1} parent=11 // pred_region
          %s256 = ssub.s32 1024, 1024
          %257 = vsyncadd [#allocation5], %s256
          %s258 = sshll.u32 [#allocation4], 4
          %s259 = int_to_ptr.vmem [resolvable:$true] %s258
          %264 = dma.hbm_to_vmem [thread:$0]  %s1, 1024, %s259, [#allocation5], 512, 512, 32
        $region16: #{cls_head_scale.1} parent=11 // pred_fallthru
          _
        // Predicated region
        $region17: #{cls_head_scale.1} parent=11 // pred_check
          %p265 = pneg %p99
        $region18: #{cls_head_scale.1} parent=11 // pred_check_branch
          %267 = sbr.rel (%p265) target = $region20
        $region19: #{cls_head_scale.1} parent=11 // pred_region
          _
        $region20: #{cls_head_scale.1} parent=11 // pred_fallthru
          _
        // Predicated region
        $region21: #{cls_head_scale.1} parent=11 // pred_check
          %p268 = pneg %p120
        $region22: #{cls_head_scale.1} parent=11 // pred_check_branch
          %270 = sbr.rel (%p268) target = $region24
        $region23: #{cls_head_scale.1} parent=11 // pred_region
          _
        $region24: #{cls_head_scale.1} parent=11 // pred_fallthru
          _
        // Predicated region
        $region25: #{cls_head_scale.1} parent=11 // pred_check
          %p271 = pneg %p141
        $region26: #{cls_head_scale.1} parent=11 // pred_check_branch
          %273 = sbr.rel (%p271) target = $region28
        $region27: #{cls_head_scale.1} parent=11 // pred_region
          _
        $region28: #{cls_head_scale.1} parent=11 // pred_fallthru
          _
        // Predicated region
        $region29: #{cls_head_scale.1} parent=11 // pred_check
          %p274 = pneg %p162
        $region30: #{cls_head_scale.1} parent=11 // pred_check_branch
          %276 = sbr.rel (%p274) target = $region32
        $region31: #{cls_head_scale.1} parent=11 // pred_region
          _
        $region32: #{cls_head_scale.1} parent=11 // pred_fallthru
          _
        // Predicated region
        $region33: #{cls_head_scale.1} parent=11 // pred_check
          %p277 = pneg %p183
        $region34: #{cls_head_scale.1} parent=11 // pred_check_branch
          %279 = sbr.rel (%p277) target = $region36
        $region35: #{cls_head_scale.1} parent=11 // pred_region
          _
        $region36: #{cls_head_scale.1} parent=11 // pred_fallthru
          _
      $region12: #{cls_head_scale.1} parent=5 // pred_fallthru
        _
      %p280 = scmp.lt.s32.totalorder %s17, 2
      // Predicated region
      $region37: #{cls_head_scale.1} parent=5 // pred_check
        %p281 = pneg %p280
      $region38: #{cls_head_scale.1} parent=5 // pred_check_branch
        %283 = sbr.rel (%p281) target = $region40
      $region39: #{cls_head_scale.1} parent=5 // pred_region
        // Predicated region
        $region41: #{cls_head_scale.1} parent=39 // pred_check
          %p284 = pneg %p51
        $region42: #{cls_head_scale.1} parent=39 // pred_check_branch
          %286 = sbr.rel (%p284) target = $region44
        $region43: #{cls_head_scale.1} parent=39 // pred_region
          %s287 = smul.u32 2, %s25
          %p288 = scmp.lt.s32.totalorder %s24, 1
          %s289 = scalar_select %p288, %s24, 1
          %p290 = scmp.lt.s32.totalorder %s287, 1
          %s291 = scalar_select %p290, %s287, 1
          %s292 = smul.addr %s289, 16
          %s293 = sadd.s32 %s291, %s292
          %s294 = smul.addr %s293, 8
          %s295 = scalar_lea.vmem %s0, %s294
          %s296 = smul.u32 2, %s25
        $region44: #{cls_head_scale.1} parent=39 // pred_fallthru
          _
      $region40: #{cls_head_scale.1} parent=5 // pred_fallthru
        _
      %p297 = scmp.le.s32.totalorder 1, %s17
      %p298 = scmp.lt.s32.totalorder %s17, 3
      %p299 = pnand %p297, %p298
      %p300 = pneg %p299
      // Predicated region
      $region45: #{cls_head_scale.1} parent=5 // pred_check
        _
      $region46: #{cls_head_scale.1} parent=5 // pred_check_branch
        %302 = sbr.rel (%p299) target = $region48
      $region47: #{cls_head_scale.1} parent=5 // pred_region
        %s303 = ssub.s32 %s17, 1
        // Predicated region
        $region49: #{cls_head_scale.1} parent=47 // pred_check
          %p304 = pneg %p78
        $region50: #{cls_head_scale.1} parent=47 // pred_check_branch
          %306 = sbr.rel (%p304) target = $region52
        $region51: #{cls_head_scale.1} parent=47 // pred_region
          %307 = dma.done [#allocation5], 1024
        $region52: #{cls_head_scale.1} parent=47 // pred_fallthru
          _
        %s308 = smul.u32 2, %s27
        %p309 = scmp.lt.s32.totalorder %s26, 1
        %s310 = scalar_select %p309, %s26, 1
        %p311 = scmp.lt.s32.totalorder %s308, 1
        %s312 = scalar_select %p311, %s308, 1
        %s313 = smul.addr %s310, 16
        %s314 = sadd.s32 %s312, %s313
        %s315 = smul.addr %s314, 8
        %s316 = scalar_lea.vmem %s0, %s315
        %p317 = pneg %p57
        %p318 = pneg %p54
        %p319 = pneg %p78
        %p320 = pneg %p75
        %p321 = pneg %p99
        %p322 = pneg %p96
        %p323 = pneg %p120
        %p324 = pneg %p117
        %p325 = pneg %p141
        %p326 = pneg %p138
        %p327 = pneg %p162
        %p328 = pneg %p159
        %p329 = pneg %p183
        %p330 = pneg %p180
        %p331 = pneg %p211
        %p332 = pneg %p208
        %s333 = smul.u32 2, %s27
        %p334 = scmp.lt.s32.totalorder %s26, 1
        %s335 = scalar_select %p334, %s26, 1
        %p336 = scmp.lt.s32.totalorder %s333, 1
        %s337 = scalar_select %p336, %s333, 1
        %s338 = smul.addr %s335, 4
        %s339 = sadd.s32 %s337, %s338
        %s340 = smul.addr %s339, 8
        %s341 = scalar_lea.vmem %s7, %s340
        %p342 = pneg %p237
        %p343 = pneg %p234
        %p344 = scmp.lt.s32.totalorder %s26, 1
        %s345 = scalar_select %p344, %s26, 1
        %s346 = smul.addr %s345, 2
        %s347 = smul.addr %s346, 8
        %s348 = scalar_lea.vmem %s8, %s347
        %s349 = smul.u32 2, %s27
        %p350 = scmp.lt.s32.totalorder %s26, 1
        %s351 = scalar_select %p350, %s26, 1
        %p352 = scmp.lt.s32.totalorder %s349, 1
        %s353 = scalar_select %p352, %s349, 1
        %s354 = smul.addr %s351, 16
        %s355 = sadd.s32 %s353, %s354
        %s356 = smul.addr %s355, 8
        %s357 = scalar_lea.vmem %s0, %s356
        %s358 = smul.u32 2, %s27
        %s359 = smul.u32 2, %s27
        %p360 = scmp.lt.s32.totalorder %s26, 1
        %s361 = scalar_select %p360, %s26, 1
        %p362 = scmp.lt.s32.totalorder %s359, 1
        %s363 = scalar_select %p362, %s359, 1
        %s364 = smul.addr %s361, 4
        %s365 = sadd.s32 %s363, %s364
        %s366 = smul.addr %s365, 8
        %s367 = scalar_lea.vmem %s7, %s366
        %s368 = smul.u32 2, %s27
        %p369 = scmp.lt.s32.totalorder %s26, 1
        %s370 = scalar_select %p369, %s26, 1
        %s371 = smul.addr %s370, 2
        %s372 = smul.addr %s371, 8
        %s373 = scalar_lea.vmem %s8, %s372
        %p375 = scmp.eq.s32.totalorder %s27, 0
        // Predicated region
        $region53: #{cls_head_scale.1} parent=47 // pred_check
          %p376 = pneg %p375
        $region54: #{cls_head_scale.1} parent=47 // pred_check_branch
          %378 = sbr.rel (%p376) target = $region56
        $region55: #{cls_head_scale.1} parent=47 // pred_region
          %v379 = vld [vmem:[#allocation4] sm:$0xff]
          %v380 = vld [vmem:[#allocation4 + $0x8] sm:$0xff]
          %v381 = vld [vmem:[#allocation4 + $0x10] sm:$0xff]
          %v382 = vld [vmem:[#allocation4 + $0x18] sm:$0xff]
          %v383 = vld [vmem:[#allocation4 + $0x20] sm:$0x3]
          %v384 = vld [vmem:[#allocation4 + $0x28] sm:$0x3]
          %v385 = vld [vmem:[#allocation4 + $0x30] sm:$0x3]
          %v386 = vld [vmem:[#allocation4 + $0x38] sm:$0x3]
          %v387 = vld [vmem:[%s2] sm:$0xff]
          %v388 = vld [vmem:[%s2 + $0x8] sm:$0xff]
          %v389 = vld [vmem:[%s2 + $0x10] sm:$0xff]
          %v390 = vld [vmem:[%s2 + $0x18] sm:$0xff]
          %v391 = vld [vmem:[%s2 + $0x20] sm:$0xff]
          %v392 = vld [vmem:[%s2 + $0x28] sm:$0xff]
          %v393 = vld [vmem:[%s2 + $0x30] sm:$0xff]
          %v394 = vld [vmem:[%s2 + $0x38] sm:$0xff]
          %v395 = vld [vmem:[%s2 + $0x40] sm:$0xff]
          %v396 = vld [vmem:[%s2 + $0x48] sm:$0xff]
          %v397 = vld [vmem:[%s2 + $0x50] sm:$0xff]
          %v398 = vld [vmem:[%s2 + $0x58] sm:$0xff]
          %v399 = vld [vmem:[%s2 + $0x60] sm:$0xff]
          %v400 = vld [vmem:[%s2 + $0x68] sm:$0xff]
          %v401 = vld [vmem:[%s2 + $0x70] sm:$0xff]
          %v402 = vld [vmem:[%s2 + $0x78] sm:$0xff]
          %v403 = vld [vmem:[%s2 + $0x80] sm:$0xff]
          %v404 = vld [vmem:[%s2 + $0x88] sm:$0xff]
          %v405 = vld [vmem:[%s2 + $0x90] sm:$0xff]
          %v406 = vld [vmem:[%s2 + $0x98] sm:$0xff]
          %v407 = vld [vmem:[%s2 + $0xa0] sm:$0xff]
          %v408 = vld [vmem:[%s2 + $0xa8] sm:$0xff]
          %v409 = vld [vmem:[%s2 + $0xb0] sm:$0xff]
          %v410 = vld [vmem:[%s2 + $0xb8] sm:$0xff]
          %v411 = vld [vmem:[%s2 + $0xc0] sm:$0xff]
          %v412 = vld [vmem:[%s2 + $0xc8] sm:$0xff]
          %v413 = vld [vmem:[%s2 + $0xd0] sm:$0xff]
          %v414 = vld [vmem:[%s2 + $0xd8] sm:$0xff]
          %v415 = vld [vmem:[%s2 + $0xe0] sm:$0xff]
          %v416 = vld [vmem:[%s2 + $0xe8] sm:$0xff]
          %v417 = vld [vmem:[%s2 + $0xf0] sm:$0xff]
          %v418 = vld [vmem:[%s2 + $0xf8] sm:$0xff]
          %v419 = vld [vmem:[%s2 + $0x100] sm:$0xff]
          %v420 = vld [vmem:[%s2 + $0x108] sm:$0xff]
          %v421 = vld [vmem:[%s2 + $0x110] sm:$0xff]
          %v422 = vld [vmem:[%s2 + $0x118] sm:$0xff]
          %v423 = vld [vmem:[%s2 + $0x120] sm:$0xff]
          %v424 = vld [vmem:[%s2 + $0x128] sm:$0xff]
          %v425 = vld [vmem:[%s2 + $0x130] sm:$0xff]
          %v426 = vld [vmem:[%s2 + $0x138] sm:$0xff]
          %v427 = vld [vmem:[%s2 + $0x140] sm:$0xff]
          %v428 = vld [vmem:[%s2 + $0x148] sm:$0xff]
          %v429 = vld [vmem:[%s2 + $0x150] sm:$0xff]
          %v430 = vld [vmem:[%s2 + $0x158] sm:$0xff]
          %v431 = vld [vmem:[%s2 + $0x160] sm:$0xff]
          %v432 = vld [vmem:[%s2 + $0x168] sm:$0xff]
          %v433 = vld [vmem:[%s2 + $0x170] sm:$0xff]
          %v434 = vld [vmem:[%s2 + $0x178] sm:$0xff]
          %v435 = vld [vmem:[%s2 + $0x180] sm:$0xff]
          %v436 = vld [vmem:[%s2 + $0x188] sm:$0xff]
          %v437 = vld [vmem:[%s2 + $0x190] sm:$0xff]
          %v438 = vld [vmem:[%s2 + $0x198] sm:$0xff]
          %v439 = vld [vmem:[%s2 + $0x1a0] sm:$0xff]
          %v440 = vld [vmem:[%s2 + $0x1a8] sm:$0xff]
          %v441 = vld [vmem:[%s2 + $0x1b0] sm:$0xff]
          %v442 = vld [vmem:[%s2 + $0x1b8] sm:$0xff]
          %v443 = vld [vmem:[%s2 + $0x1c0] sm:$0xff]
          %v444 = vld [vmem:[%s2 + $0x1c8] sm:$0xff]
          %v445 = vld [vmem:[%s2 + $0x1d0] sm:$0xff]
          %v446 = vld [vmem:[%s2 + $0x1d8] sm:$0xff]
          %v447 = vld [vmem:[%s2 + $0x1e0] sm:$0xff]
          %v448 = vld [vmem:[%s2 + $0x1e8] sm:$0xff]
          %v449 = vld [vmem:[%s2 + $0x1f0] sm:$0xff]
          %v450 = vld [vmem:[%s2 + $0x1f8] sm:$0xff]
          %v451 = vld [vmem:[%s2 + $0x200] sm:$0xff]
          %v452 = vld [vmem:[%s2 + $0x208] sm:$0xff]
          %v453 = vld [vmem:[%s2 + $0x210] sm:$0xff]
          %v454 = vld [vmem:[%s2 + $0x218] sm:$0xff]
          %v455 = vld [vmem:[%s2 + $0x220] sm:$0xff]
          %v456 = vld [vmem:[%s2 + $0x228] sm:$0xff]
          %v457 = vld [vmem:[%s2 + $0x230] sm:$0xff]
          %v458 = vld [vmem:[%s2 + $0x238] sm:$0xff]
          %v459 = vld [vmem:[%s2 + $0x240] sm:$0xff]
          %v460 = vld [vmem:[%s2 + $0x248] sm:$0xff]
          %v461 = vld [vmem:[%s2 + $0x250] sm:$0xff]
          %v462 = vld [vmem:[%s2 + $0x258] sm:$0xff]
          %v463 = vld [vmem:[%s2 + $0x260] sm:$0xff]
          %v464 = vld [vmem:[%s2 + $0x268] sm:$0xff]
          %v465 = vld [vmem:[%s2 + $0x270] sm:$0xff]
          %v466 = vld [vmem:[%s2 + $0x278] sm:$0xff]
          %v467 = vld [vmem:[%s2 + $0x280] sm:$0xff]
          %v468 = vld [vmem:[%s2 + $0x288] sm:$0xff]
          %v469 = vld [vmem:[%s2 + $0x290] sm:$0xff]
          %v470 = vld [vmem:[%s2 + $0x298] sm:$0xff]
          %v471 = vld [vmem:[%s2 + $0x2a0] sm:$0xff]
          %v472 = vld [vmem:[%s2 + $0x2a8] sm:$0xff]
          %v473 = vld [vmem:[%s2 + $0x2b0] sm:$0xff]
          %v474 = vld [vmem:[%s2 + $0x2b8] sm:$0xff]
          %v475 = vld [vmem:[%s2 + $0x2c0] sm:$0xff]
          %v476 = vld [vmem:[%s2 + $0x2c8] sm:$0xff]
          %v477 = vld [vmem:[%s2 + $0x2d0] sm:$0xff]
          %v478 = vld [vmem:[%s2 + $0x2d8] sm:$0xff]
          %v479 = vld [vmem:[%s2 + $0x2e0] sm:$0xff]
          %v480 = vld [vmem:[%s2 + $0x2e8] sm:$0xff]
          %v481 = vld [vmem:[%s2 + $0x2f0] sm:$0xff]
          %v482 = vld [vmem:[%s2 + $0x2f8] sm:$0xff]
          %v483 = vld [vmem:[%s2 + $0x300] sm:$0xff]
          %v484 = vld [vmem:[%s2 + $0x308] sm:$0xff]
          %v485 = vld [vmem:[%s2 + $0x310] sm:$0xff]
          %v486 = vld [vmem:[%s2 + $0x318] sm:$0xff]
          %v487 = vld [vmem:[%s2 + $0x320] sm:$0xff]
          %v488 = vld [vmem:[%s2 + $0x328] sm:$0xff]
          %v489 = vld [vmem:[%s2 + $0x330] sm:$0xff]
          %v490 = vld [vmem:[%s2 + $0x338] sm:$0xff]
          %v491 = vld [vmem:[%s2 + $0x340] sm:$0xff]
          %v492 = vld [vmem:[%s2 + $0x348] sm:$0xff]
          %v493 = vld [vmem:[%s2 + $0x350] sm:$0xff]
          %v494 = vld [vmem:[%s2 + $0x358] sm:$0xff]
          %v495 = vld [vmem:[%s2 + $0x360] sm:$0xff]
          %v496 = vld [vmem:[%s2 + $0x368] sm:$0xff]
          %v497 = vld [vmem:[%s2 + $0x370] sm:$0xff]
          %v498 = vld [vmem:[%s2 + $0x378] sm:$0xff]
          %v499 = vld [vmem:[%s2 + $0x380] sm:$0xff]
          %v500 = vld [vmem:[%s2 + $0x388] sm:$0xff]
          %v501 = vld [vmem:[%s2 + $0x390] sm:$0xff]
          %v502 = vld [vmem:[%s2 + $0x398] sm:$0xff]
          %v503 = vld [vmem:[%s2 + $0x3a0] sm:$0xff]
          %v504 = vld [vmem:[%s2 + $0x3a8] sm:$0xff]
          %v505 = vld [vmem:[%s2 + $0x3b0] sm:$0xff]
          %v506 = vld [vmem:[%s2 + $0x3b8] sm:$0xff]
          %v507 = vld [vmem:[%s2 + $0x3c0] sm:$0xff]
          %v508 = vld [vmem:[%s2 + $0x3c8] sm:$0xff]
          %v509 = vld [vmem:[%s2 + $0x3d0] sm:$0xff]
          %v510 = vld [vmem:[%s2 + $0x3d8] sm:$0xff]
          %v511 = vld [vmem:[%s2 + $0x3e0] sm:$0xff]
          %v512 = vld [vmem:[%s2 + $0x3e8] sm:$0xff]
          %v513 = vld [vmem:[%s2 + $0x3f0] sm:$0xff]
          %v514 = vld [vmem:[%s2 + $0x3f8] sm:$0xff]
          %v515 = vld [vmem:[%s3] sm:$0x3]
          %v517 = vlaneseq
          %v518 = vshrl.u32 %v517, 7
          %v519 = vsub.s32 0, %v518
          %v520 = vrot.slane %v515, %v519
          %v521 = vlaneseq
          %v522 = vshrl.u32 %v521, 7
          %v523 = vsub.s32 1, %v522
          %v524 = vrot.slane %v515, %v523
          %527 = vmatprep.subr.mxu0 %v388
          %528 = vmatpush1.msra.mxu0 %v387
          %529 = vmatprep.subr.mxu0 %v390
          %530 = vmatpush1.msra.mxu0 %v389
          %531 = vmatprep.subr.mxu0 %v392
          %532 = vmatpush1.msra.mxu0 %v391
          %533 = vmatprep.subr.mxu0 %v394
          %534 = vmatpush1.msra.mxu0 %v393
          %535 = vmatprep.subr.mxu0 %v396
          %536 = vmatpush1.msra.mxu0 %v395
          %537 = vmatprep.subr.mxu0 %v398
          %538 = vmatpush1.msra.mxu0 %v397
          %539 = vmatprep.subr.mxu0 %v400
          %540 = vmatpush1.msra.mxu0 %v399
          %541 = vmatprep.subr.mxu0 %v402
          %542 = vmatpush1.msra.mxu0 %v401
          %543 = vmatprep.subr.mxu0 %v404
          %544 = vmatpush1.msra.mxu0 %v403
          %545 = vmatprep.subr.mxu0 %v406
          %546 = vmatpush1.msra.mxu0 %v405
          %547 = vmatprep.subr.mxu0 %v408
          %548 = vmatpush1.msra.mxu0 %v407
          %549 = vmatprep.subr.mxu0 %v410
          %550 = vmatpush1.msra.mxu0 %v409
          %551 = vmatprep.subr.mxu0 %v412
          %552 = vmatpush1.msra.mxu0 %v411
          %553 = vmatprep.subr.mxu0 %v414
          %554 = vmatpush1.msra.mxu0 %v413
          %555 = vmatprep.subr.mxu0 %v416
          %556 = vmatpush1.msra.mxu0 %v415
          %557 = vmatprep.subr.mxu0 %v418
          %558 = vmatpush1.msra.mxu0 %v417
          %559 = vmatprep.subr.mxu0 %v420
          %560 = vmatpush1.msra.mxu0 %v419
          %561 = vmatprep.subr.mxu0 %v422
          %562 = vmatpush1.msra.mxu0 %v421
          %563 = vmatprep.subr.mxu0 %v424
          %564 = vmatpush1.msra.mxu0 %v423
          %565 = vmatprep.subr.mxu0 %v426
          %566 = vmatpush1.msra.mxu0 %v425
          %567 = vmatprep.subr.mxu0 %v428
          %568 = vmatpush1.msra.mxu0 %v427
          %569 = vmatprep.subr.mxu0 %v430
          %570 = vmatpush1.msra.mxu0 %v429
          %571 = vmatprep.subr.mxu0 %v432
          %572 = vmatpush1.msra.mxu0 %v431
          %573 = vmatprep.subr.mxu0 %v434
          %574 = vmatpush1.msra.mxu0 %v433
          %575 = vmatprep.subr.mxu0 %v436
          %576 = vmatpush1.msra.mxu0 %v435
          %577 = vmatprep.subr.mxu0 %v438
          %578 = vmatpush1.msra.mxu0 %v437
          %579 = vmatprep.subr.mxu0 %v440
          %580 = vmatpush1.msra.mxu0 %v439
          %581 = vmatprep.subr.mxu0 %v442
          %582 = vmatpush1.msra.mxu0 %v441
          %583 = vmatprep.subr.mxu0 %v444
          %584 = vmatpush1.msra.mxu0 %v443
          %585 = vmatprep.subr.mxu0 %v446
          %586 = vmatpush1.msra.mxu0 %v445
          %587 = vmatprep.subr.mxu0 %v448
          %588 = vmatpush1.msra.mxu0 %v447
          %589 = vmatprep.subr.mxu0 %v450
          %590 = vmatpush1.msra.mxu0 %v449
          %591 = vmatprep.mubr.f32.mxu0 %v380
          %592 = vmatmul.mubr.f32.gmra.mrb[0].mxu0 %v379
          %v593 = vpop.f32.mrb[0].mxu0
          %v594 = vadd.f32 %v520, %v593
          %v595 = vpop.f32.mrb[0].mxu0
          %v596 = vadd.f32 %v524, %v595
          %597 = vmatprep.mubr.f32.mxu0 %v384
          %598 = vmatmul.mubr.f32.gmra.mrb[0].mxu0 %v383
          %v599 = vpop.f32.mrb[0].mxu0
          %v600 = vadd.f32 %v520, %v599
          %v601 = vpop.f32.mrb[0].mxu0
          %v602 = vadd.f32 %v524, %v601
          %603 = vdwg.mxu0
          %604 = vmatprep.subr.mxu0 %v452
          %605 = vmatpush1.msra.mxu0 %v451
          %606 = vmatprep.subr.mxu0 %v454
          %607 = vmatpush1.msra.mxu0 %v453
          %608 = vmatprep.subr.mxu0 %v456
          %609 = vmatpush1.msra.mxu0 %v455
          %610 = vmatprep.subr.mxu0 %v458
          %611 = vmatpush1.msra.mxu0 %v457
          %612 = vmatprep.subr.mxu0 %v460
          %613 = vmatpush1.msra.mxu0 %v459
          %614 = vmatprep.subr.mxu0 %v462
          %615 = vmatpush1.msra.mxu0 %v461
          %616 = vmatprep.subr.mxu0 %v464
          %617 = vmatpush1.msra.mxu0 %v463
          %618 = vmatprep.subr.mxu0 %v466
          %619 = vmatpush1.msra.mxu0 %v465
          %620 = vmatprep.subr.mxu0 %v468
          %621 = vmatpush1.msra.mxu0 %v467
          %622 = vmatprep.subr.mxu0 %v470
          %623 = vmatpush1.msra.mxu0 %v469
          %624 = vmatprep.subr.mxu0 %v472
          %625 = vmatpush1.msra.mxu0 %v471
          %626 = vmatprep.subr.mxu0 %v474
          %627 = vmatpush1.msra.mxu0 %v473
          %628 = vmatprep.subr.mxu0 %v476
          %629 = vmatpush1.msra.mxu0 %v475
          %630 = vmatprep.subr.mxu0 %v478
          %631 = vmatpush1.msra.mxu0 %v477
          %632 = vmatprep.subr.mxu0 %v480
          %633 = vmatpush1.msra.mxu0 %v479
          %634 = vmatprep.subr.mxu0 %v482
          %635 = vmatpush1.msra.mxu0 %v481
          %636 = vmatprep.subr.mxu0 %v484
          %637 = vmatpush1.msra.mxu0 %v483
          %638 = vmatprep.subr.mxu0 %v486
          %639 = vmatpush1.msra.mxu0 %v485
          %640 = vmatprep.subr.mxu0 %v488
          %641 = vmatpush1.msra.mxu0 %v487
          %642 = vmatprep.subr.mxu0 %v490
          %643 = vmatpush1.msra.mxu0 %v489
          %644 = vmatprep.subr.mxu0 %v492
          %645 = vmatpush1.msra.mxu0 %v491
          %646 = vmatprep.subr.mxu0 %v494
          %647 = vmatpush1.msra.mxu0 %v493
          %648 = vmatprep.subr.mxu0 %v496
          %649 = vmatpush1.msra.mxu0 %v495
          %650 = vmatprep.subr.mxu0 %v498
          %651 = vmatpush1.msra.mxu0 %v497
          %652 = vmatprep.subr.mxu0 %v500
          %653 = vmatpush1.msra.mxu0 %v499
          %654 = vmatprep.subr.mxu0 %v502
          %655 = vmatpush1.msra.mxu0 %v501
          %656 = vmatprep.subr.mxu0 %v504
          %657 = vmatpush1.msra.mxu0 %v503
          %658 = vmatprep.subr.mxu0 %v506
          %659 = vmatpush1.msra.mxu0 %v505
          %660 = vmatprep.subr.mxu0 %v508
          %661 = vmatpush1.msra.mxu0 %v507
          %662 = vmatprep.subr.mxu0 %v510
          %663 = vmatpush1.msra.mxu0 %v509
          %664 = vmatprep.subr.mxu0 %v512
          %665 = vmatpush1.msra.mxu0 %v511
          %666 = vmatprep.subr.mxu0 %v514
          %667 = vmatpush1.msra.mxu0 %v513
          %668 = vmatprep.mubr.f32.mxu0 %v382
          %669 = vmatmul.mubr.f32.gmra.mrb[0].mxu0 %v381
          %v670 = vpop.f32.mrb[0].mxu0
          %v671 = vadd.f32 %v594, %v670
          %v672 = vpop.f32.mrb[0].mxu0
          %v673 = vadd.f32 %v596, %v672
          %674 = vmatprep.mubr.f32.mxu0 %v386
          %675 = vmatmul.mubr.f32.gmra.mrb[0].mxu0 %v385
          %v676 = vpop.f32.mrb[0].mxu0
          %v677 = vadd.f32 %v600, %v676
          %v678 = vpop.f32.mrb[0].mxu0
          %v679 = vadd.f32 %v602, %v678
          %680 = vdwg.mxu0
          %v681 = vmax.f32 %v671, 0.0
          %v682 = vmax.f32 %v673, 0.0
          %v683 = vmax.f32 %v677, 0.0
          %v684 = vmax.f32 %v679, 0.0
          %v685 = vld [vmem:[%s4] sm:$0xff]
          %v686 = vld [vmem:[%s4 + $0x8] sm:$0xff]
          %v687 = vld [vmem:[%s4 + $0x10] sm:$0xff]
          %v688 = vld [vmem:[%s4 + $0x18] sm:$0xff]
          %v689 = vld [vmem:[%s4 + $0x20] sm:$0xff]
          %v690 = vld [vmem:[%s4 + $0x28] sm:$0xff]
          %v691 = vld [vmem:[%s4 + $0x30] sm:$0xff]
          %v692 = vld [vmem:[%s4 + $0x38] sm:$0xff]
          %v693 = vld [vmem:[%s4 + $0x40] sm:$0xff]
          %v694 = vld [vmem:[%s4 + $0x48] sm:$0xff]
          %v695 = vld [vmem:[%s4 + $0x50] sm:$0xff]
          %v696 = vld [vmem:[%s4 + $0x58] sm:$0xff]
          %v697 = vld [vmem:[%s4 + $0x60] sm:$0xff]
          %v698 = vld [vmem:[%s4 + $0x68] sm:$0xff]
          %v699 = vld [vmem:[%s4 + $0x70] sm:$0xff]
          %v700 = vld [vmem:[%s4 + $0x78] sm:$0xff]
          %v701 = vld [vmem:[%s4 + $0x80] sm:$0xff]
          %v702 = vld [vmem:[%s4 + $0x88] sm:$0xff]
          %v703 = vld [vmem:[%s4 + $0x90] sm:$0xff]
          %v704 = vld [vmem:[%s4 + $0x98] sm:$0xff]
          %v705 = vld [vmem:[%s4 + $0xa0] sm:$0xff]
          %v706 = vld [vmem:[%s4 + $0xa8] sm:$0xff]
          %v707 = vld [vmem:[%s4 + $0xb0] sm:$0xff]
          %v708 = vld [vmem:[%s4 + $0xb8] sm:$0xff]
          %v709 = vld [vmem:[%s4 + $0xc0] sm:$0xff]
          %v710 = vld [vmem:[%s4 + $0xc8] sm:$0xff]
          %v711 = vld [vmem:[%s4 + $0xd0] sm:$0xff]
          %v712 = vld [vmem:[%s4 + $0xd8] sm:$0xff]
          %v713 = vld [vmem:[%s4 + $0xe0] sm:$0xff]
          %v714 = vld [vmem:[%s4 + $0xe8] sm:$0xff]
          %v715 = vld [vmem:[%s4 + $0xf0] sm:$0xff]
          %v716 = vld [vmem:[%s4 + $0xf8] sm:$0xff]
          %v717 = vld [vmem:[%s5] sm:$0x1]
          %v719 = vlaneseq
          %v720 = vshrl.u32 %v719, 7
          %v721 = vsub.s32 0, %v720
          %v722 = vrot.slane %v717, %v721
          %724 = vmatprep.subr.mxu0 0.0
          %725 = vmatpush1.msra.mxu0 %v685
          %726 = vmatprep.subr.mxu0 0.0
          %727 = vmatpush1.msra.mxu0 %v686
          %728 = vmatprep.subr.mxu0 0.0
          %729 = vmatpush1.msra.mxu0 %v687
          %730 = vmatprep.subr.mxu0 0.0
          %731 = vmatpush1.msra.mxu0 %v688
          %732 = vmatprep.subr.mxu0 0.0
          %733 = vmatpush1.msra.mxu0 %v689
          %734 = vmatprep.subr.mxu0 0.0
          %735 = vmatpush1.msra.mxu0 %v690
          %736 = vmatprep.subr.mxu0 0.0
          %737 = vmatpush1.msra.mxu0 %v691
          %738 = vmatprep.subr.mxu0 0.0
          %739 = vmatpush1.msra.mxu0 %v692
          %740 = vmatprep.subr.mxu0 0.0
          %741 = vmatpush1.msra.mxu0 %v693
          %742 = vmatprep.subr.mxu0 0.0
          %743 = vmatpush1.msra.mxu0 %v694
          %744 = vmatprep.subr.mxu0 0.0
          %745 = vmatpush1.msra.mxu0 %v695
          %746 = vmatprep.subr.mxu0 0.0
          %747 = vmatpush1.msra.mxu0 %v696
          %748 = vmatprep.subr.mxu0 0.0
          %749 = vmatpush1.msra.mxu0 %v697
          %750 = vmatprep.subr.mxu0 0.0
          %751 = vmatpush1.msra.mxu0 %v698
          %752 = vmatprep.subr.mxu0 0.0
          %753 = vmatpush1.msra.mxu0 %v699
          %754 = vmatprep.subr.mxu0 0.0
          %755 = vmatpush1.msra.mxu0 %v700
          %756 = vmatprep.subr.mxu0 0.0
          %757 = vmatpush1.msra.mxu0 %v701
          %758 = vmatprep.subr.mxu0 0.0
          %759 = vmatpush1.msra.mxu0 %v702
          %760 = vmatprep.subr.mxu0 0.0
          %761 = vmatpush1.msra.mxu0 %v703
          %762 = vmatprep.subr.mxu0 0.0
          %763 = vmatpush1.msra.mxu0 %v704
          %764 = vmatprep.subr.mxu0 0.0
          %765 = vmatpush1.msra.mxu0 %v705
          %766 = vmatprep.subr.mxu0 0.0
          %767 = vmatpush1.msra.mxu0 %v706
          %768 = vmatprep.subr.mxu0 0.0
          %769 = vmatpush1.msra.mxu0 %v707
          %770 = vmatprep.subr.mxu0 0.0
          %771 = vmatpush1.msra.mxu0 %v708
          %772 = vmatprep.subr.mxu0 0.0
          %773 = vmatpush1.msra.mxu0 %v709
          %774 = vmatprep.subr.mxu0 0.0
          %775 = vmatpush1.msra.mxu0 %v710
          %776 = vmatprep.subr.mxu0 0.0
          %777 = vmatpush1.msra.mxu0 %v711
          %778 = vmatprep.subr.mxu0 0.0
          %779 = vmatpush1.msra.mxu0 %v712
          %780 = vmatprep.subr.mxu0 0.0
          %781 = vmatpush1.msra.mxu0 %v713
          %782 = vmatprep.subr.mxu0 0.0
          %783 = vmatpush1.msra.mxu0 %v714
          %784 = vmatprep.subr.mxu0 0.0
          %785 = vmatpush1.msra.mxu0 %v715
          %786 = vmatprep.subr.mxu0 0.0
          %787 = vmatpush1.msra.mxu0 %v716
          %788 = vmatprep.mubr.f32.mxu0 %v682
          %789 = vmatmul.mubr.f32.gmra.mrb[0].mxu0 %v681
          %v790 = vpop.f32.mrb[0].mxu0
          %v791 = vadd.f32 %v722, %v790
          %v792 = vpop.f32.mrb[0].mxu0
          %793 = vmatprep.mubr.f32.mxu0 %v684
          %794 = vmatmul.mubr.f32.gmra.mrb[0].mxu0 %v683
          %v795 = vpop.f32.mrb[0].mxu0
          %v796 = vadd.f32 %v722, %v795
          %v797 = vpop.f32.mrb[0].mxu0
          %798 = vdwg.mxu0
          %vm799 = vcmask 523264
          %800 = vst.msk [vmem:[#allocation2] sm:$0xff] %vm799, %v791
          %vm801 = vcmask 517120
          %802 = vst.msk [vmem:[#allocation2 + $0x8] sm:$0x3] %vm801, %v796
          %vm803 = vcmask 7168
          %804 = vst.msk [vmem:[%s373] sm:$0xff] %vm803, 0.0
          %vm805 = vcmask 1024
          %806 = vst.msk [vmem:[%s373 + $0x8] sm:$0x3] %vm805, 0.0
        $region56: #{cls_head_scale.1} parent=47 // pred_fallthru
          _
        %v807 = vld [vmem:[%s357] sm:$0xff]
        %v808 = vld [vmem:[%s357 + $0x8] sm:$0xff]
        %v809 = vld [vmem:[%s357 + $0x10] sm:$0xff]
        %v810 = vld [vmem:[%s357 + $0x18] sm:$0xff]
        %v811 = vld [vmem:[%s357 + $0x20] sm:$0xff]
        %v812 = vld [vmem:[%s357 + $0x28] sm:$0xff]
        %v813 = vld [vmem:[%s357 + $0x30] sm:$0xff]
        %v814 = vld [vmem:[%s357 + $0x38] sm:$0xff]
        %v815 = vld [vmem:[%s357 + $0x40] sm:$0xff]
        %v816 = vld [vmem:[%s357 + $0x48] sm:$0xff]
        %v817 = vld [vmem:[%s357 + $0x50] sm:$0xff]
        %v818 = vld [vmem:[%s357 + $0x58] sm:$0xff]
        %v819 = vld [vmem:[%s357 + $0x60] sm:$0xff]
        %v820 = vld [vmem:[%s357 + $0x68] sm:$0xff]
        %v821 = vld [vmem:[%s357 + $0x70] sm:$0xff]
        %v822 = vld [vmem:[%s357 + $0x78] sm:$0xff]
        %v823 = vmul.f32 %v807, %v807
        %v824 = vmul.f32 %v808, %v808
        %v825 = vmul.f32 %v809, %v809
        %v826 = vmul.f32 %v810, %v810
        %v827 = vmul.f32 %v811, %v811
        %v828 = vmul.f32 %v812, %v812
        %v829 = vmul.f32 %v813, %v813
        %v830 = vmul.f32 %v814, %v814
        %v831 = vmul.f32 %v815, %v815
        %v832 = vmul.f32 %v816, %v816
        %v833 = vmul.f32 %v817, %v817
        %v834 = vmul.f32 %v818, %v818
        %v835 = vmul.f32 %v819, %v819
        %v836 = vmul.f32 %v820, %v820
        %v837 = vmul.f32 %v821, %v821
        %v838 = vmul.f32 %v822, %v822
        %v839 = vadd.f32 %v823, %v825
        %v840 = vadd.f32 %v839, %v827
        %v841 = vadd.f32 %v840, %v829
        %v842 = vadd.f32 %v841, %v831
        %v843 = vadd.f32 %v842, %v833
        %v844 = vadd.f32 %v843, %v835
        %v845 = vadd.f32 %v844, %v837
        %v846 = vrot.slane %v845, 4
        %v847 = vadd.f32 %v845, %v846
        %v848 = vrot.slane %v847, 2
        %v849 = vadd.f32 %v847, %v848
        %v850 = vrot.slane %v849, 1
        %v851 = vadd.f32 %v849, %v850
        %v852 = vadd.f32 %v824, %v826
        %v853 = vadd.f32 %v852, %v828
        %v854 = vadd.f32 %v853, %v830
        %v855 = vadd.f32 %v854, %v832
        %v856 = vadd.f32 %v855, %v834
        %v857 = vadd.f32 %v856, %v836
        %v858 = vadd.f32 %v857, %v838
        %v859 = vrot.slane %v858, 4
        %v860 = vadd.f32 %v858, %v859
        %v861 = vrot.slane %v860, 2
        %v862 = vadd.f32 %v860, %v861
        %v863 = vrot.slane %v862, 1
        %v864 = vadd.f32 %v862, %v863
        %vm865 = vcmp.gt.f32.partialorder %v851, 0.0
        %vm866 = vcmp.gt.f32.partialorder %v864, 0.0
        %v867 = vrsqrt.pop %v851
        %v868 = vrsqrt.pop %v864
        %v869 = vsel %vm865, %v867, 0.0
        %v870 = vsel %vm866, %v868, 0.0
        %v871 = vmul.f32 %v807, %v869
        %v872 = vmul.f32 %v808, %v870
        %v873 = vmul.f32 %v809, %v869
        %v874 = vmul.f32 %v810, %v870
        %v875 = vmul.f32 %v811, %v869
        %v876 = vmul.f32 %v812, %v870
        %v877 = vmul.f32 %v813, %v869
        %v878 = vmul.f32 %v814, %v870
        %v879 = vmul.f32 %v815, %v869
        %v880 = vmul.f32 %v816, %v870
        %v881 = vmul.f32 %v817, %v869
        %v882 = vmul.f32 %v818, %v870
        %v883 = vmul.f32 %v819, %v869
        %v884 = vmul.f32 %v820, %v870
        %v885 = vmul.f32 %v821, %v869
        %v886 = vmul.f32 %v822, %v870
        %v887 = vpack.c.bf16 %v873, %v871
        %v888 = vpack.c.bf16 %v874, %v872
        %v889 = vpack.c.bf16 %v877, %v875
        %v890 = vpack.c.bf16 %v878, %v876
        %v891 = vpack.c.bf16 %v881, %v879
        %v892 = vpack.c.bf16 %v882, %v880
        %v893 = vpack.c.bf16 %v885, %v883
        %v894 = vpack.c.bf16 %v886, %v884
        %v895 = vld [vmem:[#allocation2] sm:$0xff]
        %v896 = vld [vmem:[#allocation2 + $0x8] sm:$0x3]
        %v897 = vpack.c.bf16 %v896, %v895
        %vm898 = vcmask 523264
        %v900 = vsel %vm898, %v897, 0
        %902 = vmatprep.subr.bf16.mxu0 %v888
        %903 = vmatpush1.bf16.msra.mxu0 %v887
        %904 = vmatprep.subr.bf16.mxu0 %v890
        %905 = vmatpush1.bf16.msra.mxu0 %v889
        %906 = vmatprep.subr.bf16.mxu0 %v892
        %907 = vmatpush1.bf16.msra.mxu0 %v891
        %908 = vmatprep.subr.bf16.mxu0 %v894
        %909 = vmatpush1.bf16.msra.mxu0 %v893
        %910 = vmatprep.subr.bf16.mxu0 0
        %911 = vmatpush1.bf16.msra.mxu0 0
        %912 = vmatprep.subr.bf16.mxu0 0
        %913 = vmatpush1.bf16.msra.mxu0 0
        %914 = vmatprep.subr.bf16.mxu0 0
        %915 = vmatpush1.bf16.msra.mxu0 0
        %916 = vmatprep.subr.bf16.mxu0 0
        %917 = vmatpush1.bf16.msra.mxu0 0
        %918 = vmatprep.subr.bf16.mxu0 0
        %919 = vmatpush1.bf16.msra.mxu0 0
        %920 = vmatprep.subr.bf16.mxu0 0
        %921 = vmatpush1.bf16.msra.mxu0 0
        %922 = vmatprep.subr.bf16.mxu0 0
        %923 = vmatpush1.bf16.msra.mxu0 0
        %924 = vmatprep.subr.bf16.mxu0 0
        %925 = vmatpush1.bf16.msra.mxu0 0
        %926 = vmatprep.subr.bf16.mxu0 0
        %927 = vmatpush1.bf16.msra.mxu0 0
        %928 = vmatprep.subr.bf16.mxu0 0
        %929 = vmatpush1.bf16.msra.mxu0 0
        %930 = vmatprep.subr.bf16.mxu0 0
        %931 = vmatpush1.bf16.msra.mxu0 0
        %932 = vmatprep.subr.bf16.mxu0 0
        %933 = vmatpush1.bf16.msra.mxu0 0
        %934 = vmatprep.mubr.bf16.mxu0 0
        %935 = vmatmul.mubr.bf16.gmra.mrb[0].mxu0 %v900
        %v936 = vpop.f32.mrb[0].mxu0
        %v937 = vadd.f32 0.0, %v936
        %v938 = vpop.f32.mrb[0].mxu0
        %v939 = vadd.f32 0.0, %v938
        %v940 = vpop.f32.mrb[0].mxu0
        %v941 = vadd.f32 0.0, %v940
        %v942 = vpop.f32.mrb[0].mxu0
        %v943 = vadd.f32 0.0, %v942
        %944 = vdwg.mxu0
        %s945 = sld [smem:[#allocation3]]
        %v946 = vstv %s945
        %v947 = vmul.f32 %v937, %v946
        %v948 = vmul.f32 %v939, %v946
        %v949 = vmul.f32 %v941, %v946
        %v950 = vmul.f32 %v943, %v946
        %951 = vst [vmem:[%s367] sm:$0xff] %v947
        %952 = vst [vmem:[%s367 + $0x8] sm:$0xff] %v948
        %953 = vst [vmem:[%s367 + $0x10] sm:$0x3] %v949
        %954 = vst [vmem:[%s367 + $0x18] sm:$0x3] %v950
        %v955 = vlaneseq
        %v956 = vand.u32 %v955, 127
        %v957 = vadd.s32 %v956, 128
        %s958 = smul.u32 %s27, 256
        %v959 = vstv %s958
        %v960 = vadd.s32 %v956, %v959
        %v961 = vadd.s32 %v957, %v959
        %vm962 = vcmp.lt.s32.totalorder %v960, 256
        %vm963 = vcmp.lt.s32.totalorder %v961, 256
        %v964 = vsel %vm962, %v947, 0.0
        %v965 = vsel %vm963, %v948, 0.0
        %v966 = vsel %vm962, %v949, 0.0
        %v967 = vsel %vm963, %v950, 0.0
        %v968 = vadd.f32 %v964, %v965
        %969 = vadd.xlane.f32.xlu0 %v968
        %v970 = vpop.xlane.xlu0 %969
        %vm971 = vcmask 1041408
        %v972 = vsel %vm971, %v966, 0.0
        %v973 = vsel %vm971, %v967, 0.0
        %v974 = vadd.f32 %v972, %v973
        %975 = vadd.xlane.f32.xlu0 %v974
        %v976 = vpop.xlane.xlu0 %975
        %v977 = vld [vmem:[%s373] sm:$0xff]
        %v978 = vld [vmem:[%s373 + $0x8] sm:$0x3]
        %v979 = vadd.f32 %v977, %v970
        %v980 = vadd.f32 %v978, %v976
        %vm981 = vcmask 7168
        %982 = vst.msk [vmem:[%s373] sm:$0xff] %vm981, %v979
        %vm983 = vcmask 1024
        %984 = vst.msk [vmem:[%s373 + $0x8] sm:$0x3] %vm983, %v980
        %s985 = smul.u32 2, %s27
        %p986 = scmp.lt.s32.totalorder %s26, 1
        %s987 = scalar_select %p986, %s26, 1
        %p988 = scmp.lt.s32.totalorder %s985, 1
        %s989 = scalar_select %p988, %s985, 1
        %s990 = smul.addr %s987, 4
        %s991 = sadd.s32 %s989, %s990
        %s992 = smul.addr %s991, 8
        %s993 = scalar_lea.vmem %s7, %s992
        %p994 = scmp.lt.s32.totalorder %s26, 1
        %s995 = scalar_select %p994, %s26, 1
        %s996 = smul.addr %s995, 2
        %s997 = smul.addr %s996, 8
        %s998 = scalar_lea.vmem %s8, %s997
        // Predicated region
        $region57: #{cls_head_scale.1} parent=47 // pred_check
          %p999 = pneg %p208
        $region58: #{cls_head_scale.1} parent=47 // pred_check_branch
          %1001 = sbr.rel (%p999) target = $region60
        $region59: #{cls_head_scale.1} parent=47 // pred_region
          %s1002 = smul.u32 2, %s27
        $region60: #{cls_head_scale.1} parent=47 // pred_fallthru
          _
        // Predicated region
        $region61: #{cls_head_scale.1} parent=47 // pred_check
          %p1003 = pneg %p234
        $region62: #{cls_head_scale.1} parent=47 // pred_check_branch
          %1005 = sbr.rel (%p1003) target = $region64
        $region63: #{cls_head_scale.1} parent=47 // pred_region
          _
        $region64: #{cls_head_scale.1} parent=47 // pred_fallthru
          _
      $region48: #{cls_head_scale.1} parent=5 // pred_fallthru
        _
      %p1006 = scmp.le.s32.totalorder 2, %s17
      // Predicated region
      $region65: #{cls_head_scale.1} parent=5 // pred_check
        %p1007 = pneg %p1006
      $region66: #{cls_head_scale.1} parent=5 // pred_check_branch
        %1009 = sbr.rel (%p1007) target = $region68
      $region67: #{cls_head_scale.1} parent=5 // pred_region
        %s1010 = ssub.s32 %s17, 2
        // Predicated region
        $region69: #{cls_head_scale.1} parent=67 // pred_check
          %p1011 = pneg %p214
        $region70: #{cls_head_scale.1} parent=67 // pred_check_branch
          %1013 = sbr.rel (%p1011) target = $region72
        $region71: #{cls_head_scale.1} parent=67 // pred_region
          %s1014 = smul.u32 2, %s29
          %p1015 = scmp.lt.s32.totalorder %s28, 1
          %s1016 = scalar_select %p1015, %s28, 1
          %p1017 = scmp.lt.s32.totalorder %s1014, 1
          %s1018 = scalar_select %p1017, %s1014, 1
          %s1019 = smul.addr %s1016, 4
          %s1020 = sadd.s32 %s1018, %s1019
          %s1021 = smul.addr %s1020, 8
          %s1022 = scalar_lea.vmem %s7, %s1021
        $region72: #{cls_head_scale.1} parent=67 // pred_fallthru
          _
        // Predicated region
        $region73: #{cls_head_scale.1} parent=67 // pred_check
          %p1023 = pneg %p240
        $region74: #{cls_head_scale.1} parent=67 // pred_check_branch
          %1025 = sbr.rel (%p1023) target = $region76
        $region75: #{cls_head_scale.1} parent=67 // pred_region
          %p1026 = scmp.lt.s32.totalorder %s28, 1
          %s1027 = scalar_select %p1026, %s28, 1
          %s1028 = smul.addr %s1027, 2
          %s1029 = smul.addr %s1028, 8
          %s1030 = scalar_lea.vmem %s8, %s1029
        $region76: #{cls_head_scale.1} parent=67 // pred_fallthru
          _
      $region68: #{cls_head_scale.1} parent=5 // pred_fallthru
        _
    $region6: #{cls_head_scale.1} parent=1 // loop_footer
      %s21 = sadd.s32 1, %s17
    $region7: #{cls_head_scale.1} parent=1 // loop_footer_branch
      %16 = sbr.rel target = $region3
    $region8: #{cls_head_scale.1} parent=1 // loop_exit
      _
    %1031 = vsyncpa [#allocation5], 1
    %s1032 = scalar_lea.sflag [#allocation5], 1
    %1033 = vsyncpa %s1032, 1

</llo_original>
